<compile_context>
chip_gen: v5e
topology: v5e:2x2
jax: 0.10.0
libtpu: 0.0.40
codegen_flags: <defaults>
</compile_context>

<pallas_src>
import jax
import jax.numpy as jnp
from jax import lax
from jax.experimental import pallas as pl
from jax.experimental.pallas import tpu as pltpu


def _round_up(x, m):
    return ((x + m - 1) // m) * m


def _mlp_kernel(x_ref, w1_ref, b1_ref, w2_ref, b2_ref, o_ref):
    # fc1 on the MXU: (TB, D) @ (D, H) -> (TB, H), f32 accumulation.
    h = jnp.dot(x_ref[...], w1_ref[...], preferred_element_type=jnp.float32)
    # bias + ReLU on the VPU.
    h = jnp.maximum(h + b1_ref[...], 0.0)
    # fc2 (single output unit): contract H of w2 (1, H) against H of h (TB, H)
    # -> (1, TB).  Same q@k.T-style contraction the MXU handles natively, and
    # it puts the batch on the lane axis so the output store is lane-dense.
    logits = lax.dot_general(
        w2_ref[...], h,
        dimension_numbers=(((1,), (1,)), ((), ())),
        preferred_element_type=jnp.float32,
    ) + b2_ref[0, 0]                                   # (1, TB)
    # Exact sigmoid: logits is tiny, the EUP has plenty of slack here.
    o_ref[...] = jax.nn.sigmoid(logits)[None]          # (1, 1, TB)


def _auto_block_b(B, D):
    """Pick a batch tile: big enough to amortize per-step overhead, small
    enough for VMEM (v7x has only 64 MiB physical), and leaving >= 2 even
    grid steps for megacore sharding when the batch allows it."""
    # Each x row costs max(D, 128)*4 bytes in VMEM (lanes pad to 128).
    row_bytes = max(D, 128) * 4
    budget_bytes = 2 * 1024 * 1024           # ~2 MiB of x per step (x2 buffers)
    tb = max(8, budget_bytes // row_bytes)
    tb = min(tb, 8192)                        # raised cap: >=0.5-1 MiB per step
    block_b = max(8, (tb // 8) * 8)

    b_ceil = _round_up(B, 8)
    block_b = min(block_b, b_ceil)

    # v7x megacore: if the batch spans >= 2 minimal tiles, cap block_b at
    # ceil(B/2) so the grid has at least 2 steps for dimension_semantics
    # ("parallel",) to shard across both TensorCores.
    if b_ceil >= 16:
        half = _round_up(b_ceil, 16) // 2     # ceil(b_ceil/2), 8-aligned
        block_b = min(block_b, half)
    return block_b


def _vmem_limit_bytes(block_b, D, H):
    lane = lambda n: _round_up(max(n, 128), 128)
    sub = lambda n: _round_up(max(n, 8), 8)
    x_tile = block_b * lane(D) * 4            # per buffer (double-buffered)
    w1_tile = sub(D) * lane(H) * 4
    vec_tile = 8 * lane(H) * 4                # b1 / w2 rows (sublane-padded)
    h_tile = block_b * lane(H) * 4            # fc1 activation
    out_tile = 8 * lane(block_b) * 4
    need = 2 * x_tile + 2 * w1_tile + 4 * vec_tile + h_tile + 2 * out_tile
    need = int(need * 1.5) + (4 << 20)        # headroom for compiler scratch
    # Keep within v7x's 64 MiB physical VMEM; never below a sane floor.
    return max(16 << 20, min(need, 56 << 20))


def domain_classifier_forward(x, w1, b1, w2_row, b2, *, block_b=None):
    """Pallas forward for DomainClassifier.

    x      : (B, D)  float32
    w1     : (D, H)  float32   (= torch fc1.weight.T)
    b1     : (1, H)  float32
    w2_row : (1, H)  float32   (= torch fc2.weight, shaped (1, H))
    b2     : (1, 1)  float32
    returns: (B,)    float32   sigmoid probabilities (torch .squeeze(1))
    """
    B, D = x.shape
    H = w1.shape[1]

    if block_b is None:
        block_b = _auto_block_b(B, D)
    else:
        block_b = max(8, (block_b // 8) * 8)
        block_b = min(block_b, _round_up(B, 8))

    # Pad the batch so every grid step sees a full (block_b, D) tile; padded
    # rows are zeros and get sliced off the output below.
    b_padded = _round_up(max(B, block_b), block_b)
    num_tiles = b_padded // block_b
    # Prefer an even number of tiles (v7x: 2 TensorCores) when tiled at all.
    if num_tiles > 1 and num_tiles % 2 == 1:
        num_tiles += 1
        b_padded = num_tiles * block_b
    if b_padded != B:
        x = jnp.pad(x, ((0, b_padded - B), (0, 0)))

    out = pl.pallas_call(
        _mlp_kernel,
        # Lane-dense output: (tiles, 1, block_b) with the batch on lanes.
        out_shape=jax.ShapeDtypeStruct((num_tiles, 1, block_b), jnp.float32),
        grid=(num_tiles,),
        in_specs=[
            # Batch-tiled activations: double-buffered pipeline over the grid.
            pl.BlockSpec((block_b, D), lambda i: (i, 0)),
            # Weights/biases: constant block index -> kept VMEM-resident,
            # not re-DMA'd per batch tile.
            pl.BlockSpec((D, H), lambda i: (0, 0)),
            pl.BlockSpec((1, H), lambda i: (0, 0)),
            pl.BlockSpec((1, H), lambda i: (0, 0)),
            # (1,1) scalar bias lives in SMEM (no padded (8,128) VMEM tile).
            pl.BlockSpec(memory_space=pltpu.MemorySpace.SMEM),
        ],
        out_specs=pl.BlockSpec((1, 1, block_b), lambda i: (i, 0, 0)),
        compiler_params=pltpu.CompilerParams(
            # Batch tiles are independent -> shard across both TCs on v7x.
            dimension_semantics=("parallel",),
            vmem_limit_bytes=_vmem_limit_bytes(block_b, D, H),
        ),
    )(x, w1, b1, w2_row, b2)

    # (tiles, 1, block_b) -> (b_padded,) -> (B,)
    return out.reshape(-1)[:B]


def _reference_forward(x, w1, b1, w2_row, b2):
    h = jnp.maximum(x @ w1 + b1, 0.0)
    logits = jnp.sum(h * w2_row, axis=-1) + b2[0, 0]
    return jax.nn.sigmoid(logits)


if __name__ == "__main__":
    # DomainClassifier(input_dim=32) with the module-default hidden_dim=200.
    batch, input_dim, hidden_dim = 16, 32, 200

    key = jax.random.PRNGKey(0)
    kx, kw1, kb1, kw2, kb2 = jax.random.split(key, 5)

    x = jax.random.normal(kx, (batch, input_dim), dtype=jnp.float32)
    w1 = jax.random.normal(kw1, (input_dim, hidden_dim), dtype=jnp.float32) * 0.1
    b1 = jax.random.normal(kb1, (1, hidden_dim), dtype=jnp.float32) * 0.1
    w2 = jax.random.normal(kw2, (1, hidden_dim), dtype=jnp.float32) * 0.1
    b2 = jax.random.normal(kb2, (1, 1), dtype=jnp.float32) * 0.1

    # Auto block_b -> block_b=8, grid=(2,): exercises the multi-tile,
    # lane-dense-output, double-buffered path.
    preds = domain_classifier_forward(x, w1, b1, w2, b2)
    preds = jax.block_until_ready(preds)

    ref = _reference_forward(x, w1, b1, w2, b2)
    assert preds.shape == (batch,)
    # Exact sigmoid epilogue -> tight tolerance (only MXU accumulation order differs).
    assert jnp.allclose(preds, ref, atol=1e-4, rtol=1e-4), (
        float(jnp.max(jnp.abs(preds - ref))))

    print("KERNEL_OK")
</pallas_src>

<mosaic_0001>
module attributes {stable_mosaic.version = 11 : i64} {
  func.func @_mlp_kernel(%arg0: i32, %arg1: memref<8x32xf32, #tpu.memory_space<vmem>>, %arg2: memref<32x200xf32, #tpu.memory_space<vmem>>, %arg3: memref<1x200xf32, #tpu.memory_space<vmem>>, %arg4: memref<1x200xf32, #tpu.memory_space<vmem>>, %arg5: memref<1x1xf32, #tpu.memory_space<smem>>, %arg6: memref<1x1x8xf32, #tpu.memory_space<vmem>>) attributes {dimension_semantics = [#tpu.dimension_semantics<parallel>], iteration_bounds = array<i64: 2>, scalar_prefetch = 0 : i64, scratch_operands = 0 : i64, tpu.core_type = #tpu.core_type<tc>, window_params = [{transform_indices = @transform_0, window_bounds = array<i64: 8, 32>}, {pipeline_mode = #tpu.pipeline_mode<synchronous>, transform_indices = @transform_1, window_bounds = array<i64: 32, 200>}, {pipeline_mode = #tpu.pipeline_mode<synchronous>, transform_indices = @transform_2, window_bounds = array<i64: 1, 200>}, {pipeline_mode = #tpu.pipeline_mode<synchronous>, transform_indices = @transform_3, window_bounds = array<i64: 1, 200>}, {transform_indices = @transform_4, window_bounds = array<i64: 1, 1>}, {transform_indices = @transform_5, window_bounds = array<i64: 1, 1, 8>}]} {
    %c0 = arith.constant 0 : index
    %c0_0 = arith.constant 0 : index
    %0 = vector.load %arg1[%c0, %c0_0] : memref<8x32xf32, #tpu.memory_space<vmem>>, vector<8x32xf32>
    %c0_1 = arith.constant 0 : index
    %c0_2 = arith.constant 0 : index
    %1 = vector.load %arg2[%c0_1, %c0_2] : memref<32x200xf32, #tpu.memory_space<vmem>>, vector<32x200xf32>
    %cst = arith.constant dense<0.000000e+00> : vector<8x200xf32>
    %2 = tpu.matmul %0, %1, %cst {dimension_numbers = #tpu.dot_dimension_numbers<[1], [0], [0], [1], [0, 0, 1, 1], [], []>} : vector<8x32xf32>, vector<32x200xf32>, vector<8x200xf32> -> vector<8x200xf32>
    %c0_3 = arith.constant 0 : index
    %c0_4 = arith.constant 0 : index
    %3 = vector.load %arg3[%c0_3, %c0_4] : memref<1x200xf32, #tpu.memory_space<vmem>>, vector<1x200xf32>
    %4 = vector.broadcast %3 : vector<1x200xf32> to vector<8x200xf32>
    %5 = arith.addf %2, %4 : vector<8x200xf32>
    %cst_5 = arith.constant 0.000000e+00 : f32
    %6 = vector.broadcast %cst_5 : f32 to vector<8x200xf32>
    %7 = arith.maximumf %5, %6 : vector<8x200xf32>
    %c0_6 = arith.constant 0 : index
    %c0_7 = arith.constant 0 : index
    %8 = vector.load %arg4[%c0_6, %c0_7] : memref<1x200xf32, #tpu.memory_space<vmem>>, vector<1x200xf32>
    %cst_8 = arith.constant dense<0.000000e+00> : vector<1x8xf32>
    %9 = tpu.matmul %8, %7, %cst_8 {dimension_numbers = #tpu.dot_dimension_numbers<[1], [1], [0], [0], [0, 0, 1, 0], [], []>} : vector<1x200xf32>, vector<8x200xf32>, vector<1x8xf32> -> vector<1x8xf32>
    %c0_9 = arith.constant 0 : index
    %c0_10 = arith.constant 0 : index
    %10 = memref.load %arg5[%c0_9, %c0_10] : memref<1x1xf32, #tpu.memory_space<smem>>
    %11 = vector.broadcast %10 : f32 to vector<1x8xf32>
    %12 = arith.addf %9, %11 : vector<1x8xf32>
    %13 = arith.negf %12 : vector<1x8xf32>
    %14 = math.exp %13 : vector<1x8xf32>
    %cst_11 = arith.constant 1.000000e+00 : f32
    %15 = vector.broadcast %cst_11 : f32 to vector<1x8xf32>
    %16 = arith.addf %15, %14 : vector<1x8xf32>
    %17 = arith.divf %15, %16 : vector<1x8xf32>
    %18 = vector.shape_cast %17 : vector<1x8xf32> to vector<1x1x8xf32>
    %c0_12 = arith.constant 0 : index
    %c0_13 = arith.constant 0 : index
    %c0_14 = arith.constant 0 : index
    %19 = vector.load %arg6[%c0_12, %c0_13, %c0_14] : memref<1x1x8xf32, #tpu.memory_space<vmem>>, vector<1x1x8xf32>
    tpu.vector_store %arg6[%c0_12, %c0_13, %c0_14], %18 {strides = array<i32>} : memref<1x1x8xf32, #tpu.memory_space<vmem>>, vector<1x1x8xf32>,
    return
  }
  func.func @transform_0(%arg0: i32) -> (i32, i32) {
    %c0_i32 = arith.constant 0 : i32
    %c0_i32_0 = arith.constant 0 : i32
    return %arg0, %c0_i32 : i32, i32
  }
  func.func @transform_1(%arg0: i32) -> (i32, i32) {
    %c0_i32 = arith.constant 0 : i32
    %c0_i32_0 = arith.constant 0 : i32
    %c0_i32_1 = arith.constant 0 : i32
    return %c0_i32, %c0_i32_0 : i32, i32
  }
  func.func @transform_2(%arg0: i32) -> (i32, i32) {
    %c0_i32 = arith.constant 0 : i32
    %c0_i32_0 = arith.constant 0 : i32
    %c0_i32_1 = arith.constant 0 : i32
    return %c0_i32, %c0_i32_0 : i32, i32
  }
  func.func @transform_3(%arg0: i32) -> (i32, i32) {
    %c0_i32 = arith.constant 0 : i32
    %c0_i32_0 = arith.constant 0 : i32
    %c0_i32_1 = arith.constant 0 : i32
    return %c0_i32, %c0_i32_0 : i32, i32
  }
  func.func @transform_4(%arg0: i32) -> (i32, i32) {
    %c0_i32 = arith.constant 0 : i32
    %c0_i32_0 = arith.constant 0 : i32
    %c0_i32_1 = arith.constant 0 : i32
    return %c0_i32, %c0_i32_0 : i32, i32
  }
  func.func @transform_5(%arg0: i32) -> (i32, i32, i32) {
    %c0_i32 = arith.constant 0 : i32
    %c0_i32_0 = arith.constant 0 : i32
    %c0_i32_1 = arith.constant 0 : i32
    return %arg0, %c0_i32, %c0_i32_0 : i32, i32, i32
  }
}

</mosaic_0001>

<llo_original>
// kernel: tpu_custom_call.1
$region0: #{tpu_custom_call.1}
  #allocation0 [shape = 'u32[]', space=smem, size = 0x4, offset = 0x4, fixed_abs, tag = 'smem constant byte address 0x4 - core index']
  #allocation1 [shape = 'u32[72,128]{1,0:T(1,128)}', space=vmem, size = 0x9000, scoped, tag = 'internal scratch']
  #allocation2 [shape = 'f32[1,1]{1,0:T(1,128)S(6)}', space=smem, size = 0x200, scoped, tag = 'scoped memory for tpu_custom_call.1']
  %s0 = inlined_call_operand.hbm [shape: f32[16,32], index: 0, kind: input, shape index: {}]
  %s1 = inlined_call_operand.hbm [shape: f32[32,200], index: 1, kind: input, shape index: {}]
  %s2 = inlined_call_operand.vmem [shape: f32[1,200], index: 2, kind: input, shape index: {}]
  %s3 = inlined_call_operand.vmem [shape: f32[1,200], index: 3, kind: input, shape index: {}]
  %s4 = inlined_call_operand.<no memory space> [shape: f32[1,1], index: 4, kind: input, shape index: {}]
  %s5 = inlined_call_operand.hbm [shape: f32[2,1,8], index: 5, kind: output, shape index: {}]
  %s6 = sld [smem:[#allocation0]]
  $region61: #{tpu_custom_call.1} parent=0
    _
  %s8 = ssub.s32 1, %s6
  %s9 = scalar_select 0, %s8, %s6
  %10 = sst [smem:[#allocation2]] %s4
  $region1: #{tpu_custom_call.1} parent=0
    #allocation3 [shape = 'u8[8192]{0}', space=vmem, size = 0x2000, scoped, tag = 'input window, operand 0']
    #allocation4 [shape = 's32[2]{0}', space=sflag, size = 0x8, scoped, tag = 'scoped memory for tpu_custom_call.1']
    #allocation5 [shape = 's32[2]{0}', space=sflag, size = 0x8, scoped, tag = 'scoped memory for tpu_custom_call.1']
    #allocation6 [shape = 'u8[32768]{0}', space=vmem, size = 0x8000, scoped, tag = 'input window, operand 1, single buffered']
    #allocation7 [shape = 's32[1]{0}', space=sflag, size = 0x4, scoped, tag = 'scoped memory for tpu_custom_call.1']
    #allocation8 [shape = 'u8[1024]{0}', space=vmem, size = 0x400, scoped, tag = 'output window, operand 0']
    %11 = vsyncpa [#allocation4], 0
    %s12 = scalar_lea.sflag [#allocation4], 1
    %13 = vsyncpa %s12, 0
    %14 = vsyncpa [#allocation7], 0
    %15 = vsyncpa [#allocation5], 0
    %s16 = scalar_lea.sflag [#allocation5], 1
    %17 = vsyncpa %s16, 0
    loop: start=0, step=1, limit=4
    $region2: #{tpu_custom_call.1} parent=1 // loop_pre_header
      _
    $region3: #{tpu_custom_call.1} parent=1 // loop_header
      %s19 = sphi 0, %s23
      %p20 = scmp.ge.s32.totalorder %s19, 4
      %s29 = sphi 0, %s31
      %s32 = sphi 0, %s29
      %s33 = sphi 0, %s32
      %s49 = sphi 0, %s33
      %s53 = sphi 0, %s53
      %s55 = sphi 0, %s53
      %s56 = sphi 0, %s55
      %s70 = sphi 0, %s56
      %s74 = sphi 0, %s74
      %s76 = sphi 0, %s74
      %s77 = sphi 0, %s76
      %s91 = sphi 0, %s77
      %s95 = sphi 0, %s95
      %s97 = sphi 0, %s95
      %s98 = sphi 0, %s97
      %s112 = sphi 0, %s98
      %s116 = sphi 0, %s116
      %s118 = sphi 0, %s116
      %s119 = sphi 0, %s118
      %s133 = sphi 0, %s119
      %s139 = sphi 0, %s141
      %s142 = sphi 0, %s139
      %s143 = sphi 0, %s142
      %s159 = sphi 0, %s143
    $region4: #{tpu_custom_call.1} parent=1 // loop_header_branch
      %22 = sbr.rel (%p20) target = $region8
    $region5: #{tpu_custom_call.1} parent=1 // loop_body
      %s24 = ssub.s32 %s19, 1
      %s25 = ssub.s32 %s19, 2
      %s26 = sadd.s32 %s19, 1
      %s27 = ssub.s32 %s19, %s26
      %p28 = scmp.eq.s32.totalorder %s27, 0
      %s30 = sadd.s32 %s29, 1
      %s31 = scalar_select %p28, %s29, %s30
      %p34 = pneg %p28
      %p35 = scmp.eq.s32.totalorder %s19, 1
      %p36 = por %p34, %p35
      %p37 = scmp.ne.s32.totalorder %s29, %s32
      %p38 = scmp.eq.s32.totalorder %s19, 0
      %p39 = por %p37, %p38
      %p40 = scmp.ne.s32.totalorder %s29, %s32
      %p41 = scmp.eq.s32.totalorder %s24, 1
      %p42 = por %p40, %p41
      %p43 = scmp.ne.s32.totalorder %s32, %s33
      %p44 = scmp.eq.s32.totalorder %s24, 0
      %p45 = por %p43, %p44
      %p46 = scmp.ne.s32.totalorder %s32, %s33
      %p47 = scmp.eq.s32.totalorder %s25, 1
      %p48 = por %p46, %p47
      %p50 = scmp.ne.s32.totalorder %s33, %s49
      %p51 = scmp.eq.s32.totalorder %s25, 0
      %p52 = por %p50, %p51
      %s54 = sadd.s32 %s53, 1
      %p57 = scmp.eq.s32.totalorder %s19, 1
      %p58 = scmp.ne.s32.totalorder %s53, %s55
      %p59 = scmp.eq.s32.totalorder %s19, 0
      %p60 = por %p58, %p59
      %p61 = scmp.ne.s32.totalorder %s53, %s55
      %p62 = scmp.eq.s32.totalorder %s24, 1
      %p63 = por %p61, %p62
      %p64 = scmp.ne.s32.totalorder %s55, %s56
      %p65 = scmp.eq.s32.totalorder %s24, 0
      %p66 = por %p64, %p65
      %p67 = scmp.ne.s32.totalorder %s55, %s56
      %p68 = scmp.eq.s32.totalorder %s25, 1
      %p69 = por %p67, %p68
      %p71 = scmp.ne.s32.totalorder %s56, %s70
      %p72 = scmp.eq.s32.totalorder %s25, 0
      %p73 = por %p71, %p72
      %s75 = sadd.s32 %s74, 1
      %p78 = scmp.eq.s32.totalorder %s19, 1
      %p79 = scmp.ne.s32.totalorder %s74, %s76
      %p80 = scmp.eq.s32.totalorder %s19, 0
      %p81 = por %p79, %p80
      %p82 = scmp.ne.s32.totalorder %s74, %s76
      %p83 = scmp.eq.s32.totalorder %s24, 1
      %p84 = por %p82, %p83
      %p85 = scmp.ne.s32.totalorder %s76, %s77
      %p86 = scmp.eq.s32.totalorder %s24, 0
      %p87 = por %p85, %p86
      %p88 = scmp.ne.s32.totalorder %s76, %s77
      %p89 = scmp.eq.s32.totalorder %s25, 1
      %p90 = por %p88, %p89
      %p92 = scmp.ne.s32.totalorder %s77, %s91
      %p93 = scmp.eq.s32.totalorder %s25, 0
      %p94 = por %p92, %p93
      %s96 = sadd.s32 %s95, 1
      %p99 = scmp.eq.s32.totalorder %s19, 1
      %p100 = scmp.ne.s32.totalorder %s95, %s97
      %p101 = scmp.eq.s32.totalorder %s19, 0
      %p102 = por %p100, %p101
      %p103 = scmp.ne.s32.totalorder %s95, %s97
      %p104 = scmp.eq.s32.totalorder %s24, 1
      %p105 = por %p103, %p104
      %p106 = scmp.ne.s32.totalorder %s97, %s98
      %p107 = scmp.eq.s32.totalorder %s24, 0
      %p108 = por %p106, %p107
      %p109 = scmp.ne.s32.totalorder %s97, %s98
      %p110 = scmp.eq.s32.totalorder %s25, 1
      %p111 = por %p109, %p110
      %p113 = scmp.ne.s32.totalorder %s98, %s112
      %p114 = scmp.eq.s32.totalorder %s25, 0
      %p115 = por %p113, %p114
      %s117 = sadd.s32 %s116, 1
      %p120 = scmp.eq.s32.totalorder %s19, 1
      %p121 = scmp.ne.s32.totalorder %s116, %s118
      %p122 = scmp.eq.s32.totalorder %s19, 0
      %p123 = por %p121, %p122
      %p124 = scmp.ne.s32.totalorder %s116, %s118
      %p125 = scmp.eq.s32.totalorder %s24, 1
      %p126 = por %p124, %p125
      %p127 = scmp.ne.s32.totalorder %s118, %s119
      %p128 = scmp.eq.s32.totalorder %s24, 0
      %p129 = por %p127, %p128
      %p130 = scmp.ne.s32.totalorder %s118, %s119
      %p131 = scmp.eq.s32.totalorder %s25, 1
      %p132 = por %p130, %p131
      %p134 = scmp.ne.s32.totalorder %s119, %s133
      %p135 = scmp.eq.s32.totalorder %s25, 0
      %p136 = por %p134, %p135
      %s137 = ssub.s32 %s19, %s26
      %p138 = scmp.eq.s32.totalorder %s137, 0
      %s140 = sadd.s32 %s139, 1
      %s141 = scalar_select %p138, %s139, %s140
      %p144 = pneg %p138
      %p145 = scmp.eq.s32.totalorder %s19, 1
      %p146 = por %p144, %p145
      %p147 = scmp.ne.s32.totalorder %s139, %s142
      %p148 = scmp.eq.s32.totalorder %s19, 0
      %p149 = por %p147, %p148
      %p150 = scmp.ne.s32.totalorder %s139, %s142
      %p151 = scmp.eq.s32.totalorder %s24, 1
      %p152 = por %p150, %p151
      %p153 = scmp.ne.s32.totalorder %s142, %s143
      %p154 = scmp.eq.s32.totalorder %s24, 0
      %p155 = por %p153, %p154
      %p156 = scmp.ne.s32.totalorder %s142, %s143
      %p157 = scmp.eq.s32.totalorder %s25, 1
      %p158 = por %p156, %p157
      %p160 = scmp.ne.s32.totalorder %s143, %s159
      %p161 = scmp.eq.s32.totalorder %s25, 0
      %p162 = por %p160, %p161
      %p163 = scmp.le.s32.totalorder 1, %s19
      %p164 = scmp.lt.s32.totalorder %s19, 3
      %p165 = pnand %p163, %p164
      %p166 = pneg %p165
      // Predicated region
      $region9: #{tpu_custom_call.1} parent=5 // pred_check
        _
      $region10: #{tpu_custom_call.1} parent=5 // pred_check_branch
        %168 = sbr.rel (%p165) target = $region12
      $region11: #{tpu_custom_call.1} parent=5 // pred_region
        %s169 = ssub.s32 %s19, 1
        // Predicated region
        $region13: #{tpu_custom_call.1} parent=11 // pred_check
          %p170 = pneg %p66
        $region14: #{tpu_custom_call.1} parent=11 // pred_check_branch
          %172 = sbr.rel (%p170) target = $region16
        $region15: #{tpu_custom_call.1} parent=11 // pred_region
          %174 = vsyncadd [#allocation7], 0
          %s175 = sshll.u32 %s1, 4
          %s176 = int_to_ptr.hbm [resolvable:$true] %s175
          %s177 = sshll.u32 [#allocation6], 4
          %s178 = int_to_ptr.vmem [resolvable:$true] %s177
          %183 = dma.hbm_to_vmem [thread:$0]  %s176, 1024, %s178, [#allocation7], 256, 256, 16
        $region16: #{tpu_custom_call.1} parent=11 // pred_fallthru
          _
        // Predicated region
        $region17: #{tpu_custom_call.1} parent=11 // pred_check
          %p184 = pneg %p87
        $region18: #{tpu_custom_call.1} parent=11 // pred_check_branch
          %186 = sbr.rel (%p184) target = $region20
        $region19: #{tpu_custom_call.1} parent=11 // pred_region
          _
        $region20: #{tpu_custom_call.1} parent=11 // pred_fallthru
          _
        // Predicated region
        $region21: #{tpu_custom_call.1} parent=11 // pred_check
          %p187 = pneg %p108
        $region22: #{tpu_custom_call.1} parent=11 // pred_check_branch
          %189 = sbr.rel (%p187) target = $region24
        $region23: #{tpu_custom_call.1} parent=11 // pred_region
          _
        $region24: #{tpu_custom_call.1} parent=11 // pred_fallthru
          _
        // Predicated region
        $region25: #{tpu_custom_call.1} parent=11 // pred_check
          %p190 = pneg %p129
        $region26: #{tpu_custom_call.1} parent=11 // pred_check_branch
          %192 = sbr.rel (%p190) target = $region28
        $region27: #{tpu_custom_call.1} parent=11 // pred_region
          _
        $region28: #{tpu_custom_call.1} parent=11 // pred_fallthru
          _
      $region12: #{tpu_custom_call.1} parent=5 // pred_fallthru
        _
      %p193 = scmp.lt.s32.totalorder %s19, 2
      // Predicated region
      $region29: #{tpu_custom_call.1} parent=5 // pred_check
        %p194 = pneg %p193
      $region30: #{tpu_custom_call.1} parent=5 // pred_check_branch
        %196 = sbr.rel (%p194) target = $region32
      $region31: #{tpu_custom_call.1} parent=5 // pred_region
        // Predicated region
        $region33: #{tpu_custom_call.1} parent=31 // pred_check
          %p197 = pneg %p39
        $region34: #{tpu_custom_call.1} parent=31 // pred_check_branch
          %199 = sbr.rel (%p197) target = $region36
        $region35: #{tpu_custom_call.1} parent=31 // pred_region
          %s200 = sand.u32 %s29, 1
          %s201 = scalar_lea.sflag [#allocation4], %s200
          %s202 = sand.u32 %s29, 1
          %s203 = smul.addr %s202, 8
          %s204 = scalar_lea.vmem [#allocation3], %s203
          %206 = vsyncadd %s201, 0
          %s207 = smul.addr %s19, 8
          %s208 = scalar_lea.hbm %s0, %s207
          %s210 = sshll.u32 %s208, 4
          %s211 = int_to_ptr.hbm [resolvable:$true] %s210
          %s212 = sshll.u32 %s204, 4
          %s213 = int_to_ptr.vmem [resolvable:$true] %s212
          %215 = dma.hbm_to_vmem [thread:$0]  %s211, 128, %s213, %s201
        $region36: #{tpu_custom_call.1} parent=31 // pred_fallthru
          _
      $region32: #{tpu_custom_call.1} parent=5 // pred_fallthru
        _
      %p216 = scmp.le.s32.totalorder 1, %s19
      %p217 = scmp.lt.s32.totalorder %s19, 3
      %p218 = pnand %p216, %p217
      %p219 = pneg %p218
      // Predicated region
      $region37: #{tpu_custom_call.1} parent=5 // pred_check
        _
      $region38: #{tpu_custom_call.1} parent=5 // pred_check_branch
        %221 = sbr.rel (%p218) target = $region40
      $region39: #{tpu_custom_call.1} parent=5 // pred_region
        %s222 = ssub.s32 %s19, 1
        %s223 = sand.u32 %s32, 1
        %s224 = scalar_lea.sflag [#allocation4], %s223
        %s225 = sand.u32 %s32, 1
        %s226 = smul.addr %s225, 8
        %s227 = scalar_lea.vmem [#allocation3], %s226
        // Predicated region
        $region41: #{tpu_custom_call.1} parent=39 // pred_check
          %p228 = pneg %p45
        $region42: #{tpu_custom_call.1} parent=39 // pred_check_branch
          %230 = sbr.rel (%p228) target = $region44
        $region43: #{tpu_custom_call.1} parent=39 // pred_region
          %232 = dma.done %s224, 128
        $region44: #{tpu_custom_call.1} parent=39 // pred_fallthru
          _
        // Predicated region
        $region45: #{tpu_custom_call.1} parent=39 // pred_check
          %p233 = pneg %p66
        $region46: #{tpu_custom_call.1} parent=39 // pred_check_branch
          %235 = sbr.rel (%p233) target = $region48
        $region47: #{tpu_custom_call.1} parent=39 // pred_region
          %237 = dma.done [#allocation7], 1024
        $region48: #{tpu_custom_call.1} parent=39 // pred_fallthru
          _
        %s238 = sand.u32 %s32, 1
        %s239 = scalar_lea.sflag [#allocation4], %s238
        %s240 = sand.u32 %s32, 1
        %s241 = smul.addr %s240, 8
        %s242 = scalar_lea.vmem [#allocation3], %s241
        %p243 = pneg %p45
        %p244 = pneg %p42
        %p245 = pneg %p66
        %p246 = pneg %p63
        %p247 = pneg %p87
        %p248 = pneg %p84
        %p249 = pneg %p108
        %p250 = pneg %p105
        %p251 = pneg %p129
        %p252 = pneg %p126
        %p253 = pneg %p155
        %p254 = pneg %p152
        %s255 = sand.u32 %s142, 1
        %s256 = scalar_lea.sflag [#allocation5], %s255
        %s257 = sand.u32 %s142, 1
        %s258 = scalar_lea.vmem [#allocation8], %s257
        %v259 = vld [vmem:[%s227] sm:$0xff]
        %v260 = vld [vmem:[#allocation6] sm:$0xff]
        %v261 = vld [vmem:[#allocation6 + $0x8] sm:$0xff]
        %v262 = vld [vmem:[#allocation6 + $0x10] sm:$0xff]
        %v263 = vld [vmem:[#allocation6 + $0x18] sm:$0xff]
        %v264 = vld [vmem:[#allocation6 + $0x20] sm:$0xff]
        %v265 = vld [vmem:[#allocation6 + $0x28] sm:$0xff]
        %v266 = vld [vmem:[#allocation6 + $0x30] sm:$0xff]
        %v267 = vld [vmem:[#allocation6 + $0x38] sm:$0xff]
        %v268 = vld [vmem:[%s2] sm:$0x3]
        %v270 = vperm.slane %v268, 0
        %v271 = vperm.slane %v268, 1
        %vm274 = vcmask 261120
        %v276 = vsel %vm274, %v259, 0
        %278 = vmatpush.msra.mxu0 0.0
        %279 = vmatpush.msra.mxu0 0.0
        %280 = vmatpush.msra.mxu0 0.0
        %281 = vmatpush.msra.mxu0 0.0
        %282 = vmatpush.msra.mxu0 0.0
        %283 = vmatpush.msra.mxu0 0.0
        %284 = vmatpush.msra.mxu0 0.0
        %285 = vmatpush.msra.mxu0 0.0
        %286 = vmatpush.msra.mxu0 0.0
        %287 = vmatpush.msra.mxu0 0.0
        %288 = vmatpush.msra.mxu0 0.0
        %289 = vmatpush.msra.mxu0 0.0
        %290 = vmatpush.msra.mxu0 %v266
        %291 = vmatpush.msra.mxu0 %v264
        %292 = vmatpush.msra.mxu0 %v262
        %293 = vmatpush.msra.mxu0 %v260
        %294 = vmatmul.f32.gmra.mxu0 %v276
        %v295 = vpop.f32.mrf.mxu0
        %v296 = vadd.f32 %v270, %v295
        %297 = vdwg.mxu0
        %298 = vmatpush.msra.mxu0 0.0
        %299 = vmatpush.msra.mxu0 0.0
        %300 = vmatpush.msra.mxu0 0.0
        %301 = vmatpush.msra.mxu0 0.0
        %302 = vmatpush.msra.mxu0 0.0
        %303 = vmatpush.msra.mxu0 0.0
        %304 = vmatpush.msra.mxu0 0.0
        %305 = vmatpush.msra.mxu0 0.0
        %306 = vmatpush.msra.mxu0 0.0
        %307 = vmatpush.msra.mxu0 0.0
        %308 = vmatpush.msra.mxu0 0.0
        %309 = vmatpush.msra.mxu0 0.0
        %310 = vmatpush.msra.mxu0 %v267
        %311 = vmatpush.msra.mxu0 %v265
        %312 = vmatpush.msra.mxu0 %v263
        %313 = vmatpush.msra.mxu0 %v261
        %314 = vmatmul.f32.gmra.mxu0 %v276
        %v315 = vpop.f32.mrf.mxu0
        %v316 = vadd.f32 %v271, %v315
        %317 = vdwg.mxu0
        %v318 = vmax.f32 %v296, 0.0
        %v319 = vmax.f32 %v316, 0.0
        %v320 = vld [vmem:[%s3] sm:$0x3]
        %s321 = sld [smem:[#allocation2]]
        %v322 = vstv %s321
        %v324 = vperm.slane %v320, 0
        %v325 = vperm.slane %v320, 1
        %vm327 = vcmask 588800
        %v328 = vsel %vm327, %v325, 0
        %v331 = vsel %vm327, %v319, 0
        %333 = vmatpush.xpose.msra.mxu0 0.0
        %334 = vmatpush.xpose.msra.mxu0 0.0
        %335 = vmatpush.xpose.msra.mxu0 0.0
        %336 = vmatpush.xpose.msra.mxu0 0.0
        %337 = vmatpush.xpose.msra.mxu0 0.0
        %338 = vmatpush.xpose.msra.mxu0 0.0
        %339 = vmatpush.xpose.msra.mxu0 0.0
        %340 = vmatpush.xpose.msra.mxu0 0.0
        %341 = vmatpush.xpose.msra.mxu0 0.0
        %342 = vmatpush.xpose.msra.mxu0 0.0
        %343 = vmatpush.xpose.msra.mxu0 0.0
        %344 = vmatpush.xpose.msra.mxu0 0.0
        %345 = vmatpush.xpose.msra.mxu0 0.0
        %346 = vmatpush.xpose.msra.mxu0 0.0
        %347 = vmatpush.xpose.msra.mxu0 0.0
        %348 = vmatpush.xpose.msra.mxu0 %v318
        %349 = vmatmul.f32.gmra.mxu0 %v324
        %v350 = vpop.f32.mrf.mxu0
        %v351 = vadd.f32 %v322, %v350
        %352 = vdwg.mxu0
        %353 = vmatpush.xpose.msra.mxu0 0.0
        %354 = vmatpush.xpose.msra.mxu0 0.0
        %355 = vmatpush.xpose.msra.mxu0 0.0
        %356 = vmatpush.xpose.msra.mxu0 0.0
        %357 = vmatpush.xpose.msra.mxu0 0.0
        %358 = vmatpush.xpose.msra.mxu0 0.0
        %359 = vmatpush.xpose.msra.mxu0 0.0
        %360 = vmatpush.xpose.msra.mxu0 0.0
        %361 = vmatpush.xpose.msra.mxu0 0.0
        %362 = vmatpush.xpose.msra.mxu0 0.0
        %363 = vmatpush.xpose.msra.mxu0 0.0
        %364 = vmatpush.xpose.msra.mxu0 0.0
        %365 = vmatpush.xpose.msra.mxu0 0.0
        %366 = vmatpush.xpose.msra.mxu0 0.0
        %367 = vmatpush.xpose.msra.mxu0 0.0
        %368 = vmatpush.xpose.msra.mxu0 %v331
        %369 = vmatmul.f32.gmra.mxu0 %v328
        %v370 = vpop.f32.mrf.mxu0
        %v371 = vadd.f32 %v351, %v370
        %372 = vdwg.mxu0
        %v373 = vxor.u32 %v371, 2147483648
        %v374 = vmul.f32 %v373, 1.442695
        %v375 = vpow.pop %v374
        %v376 = vadd.f32 %v375, 1.0
        %v377 = vrcp.pop %v376
        %v378 = vmul.f32 %v376, %v377
        %v379 = vsub.f32 1.0, %v378
        %v380 = vmul.f32 %v377, %v379
        %v381 = vadd.f32 %v377, %v380
        %vm382 = vweird.f32 %v376
        %vm383 = vweird.f32 %v377
        %vm384 = vmor %vm382, %vm383
        %v385 = vsel %vm384, %v377, %v381
        %v386 = vand.u32 2147483647, %v376
        %vm387 = vcmp.eq.f32.partialorder %v386, 8.507059e+37
        %v388 = vand.u32 %v376, 2147483648
        %v389 = vor.u32 1.1754944e-38, %v388
        %v390 = vsel %vm387, %v389, %v385
        %v391 = vmul.f32 1.0, %v390
        %vm392 = vcmask 57344
        %393 = vst.msk [vmem:[%s258] sm:$0x1] %vm392, %v391
        %s394 = sand.u32 %s142, 1
        %s395 = scalar_lea.sflag [#allocation5], %s394
        %s396 = sand.u32 %s142, 1
        %s397 = scalar_lea.vmem [#allocation8], %s396
        // Predicated region
        $region49: #{tpu_custom_call.1} parent=39 // pred_check
          %p398 = pneg %p152
        $region50: #{tpu_custom_call.1} parent=39 // pred_check_branch
          %400 = sbr.rel (%p398) target = $region52
        $region51: #{tpu_custom_call.1} parent=39 // pred_region
          %402 = vsyncadd %s395, 0
          %s403 = scalar_lea.hbm %s5, %s24
          %s405 = sshll.u32 %s397, 4
          %s406 = int_to_ptr.vmem [resolvable:$true] %s405
          %s407 = sshll.u32 %s403, 4
          %s408 = int_to_ptr.hbm [resolvable:$true] %s407
          %410 = dma.vmem_to_hbm [thread:$0]  %s406, 16, %s408, %s395
        $region52: #{tpu_custom_call.1} parent=39 // pred_fallthru
          _
      $region40: #{tpu_custom_call.1} parent=5 // pred_fallthru
        _
      %p411 = scmp.le.s32.totalorder 2, %s19
      // Predicated region
      $region53: #{tpu_custom_call.1} parent=5 // pred_check
        %p412 = pneg %p411
      $region54: #{tpu_custom_call.1} parent=5 // pred_check_branch
        %414 = sbr.rel (%p412) target = $region56
      $region55: #{tpu_custom_call.1} parent=5 // pred_region
        %s415 = ssub.s32 %s19, 2
        // Predicated region
        $region57: #{tpu_custom_call.1} parent=55 // pred_check
          %p416 = pneg %p158
        $region58: #{tpu_custom_call.1} parent=55 // pred_check_branch
          %418 = sbr.rel (%p416) target = $region60
        $region59: #{tpu_custom_call.1} parent=55 // pred_region
          %s419 = sand.u32 %s143, 1
          %s420 = scalar_lea.sflag [#allocation5], %s419
          %s421 = sand.u32 %s143, 1
          %s422 = scalar_lea.vmem [#allocation8], %s421
          %424 = dma.done %s420, 16
        $region60: #{tpu_custom_call.1} parent=55 // pred_fallthru
          _
      $region56: #{tpu_custom_call.1} parent=5 // pred_fallthru
        _
    $region6: #{tpu_custom_call.1} parent=1 // loop_footer
      %s23 = sadd.s32 1, %s19
    $region7: #{tpu_custom_call.1} parent=1 // loop_footer_branch
      %18 = sbr.rel target = $region3
    $region8: #{tpu_custom_call.1} parent=1 // loop_exit
      _
    %425 = vsyncpa [#allocation4], 1
    %s426 = scalar_lea.sflag [#allocation4], 1
    %427 = vsyncpa %s426, 1
    %428 = vsyncpa [#allocation7], 1
    %429 = vsyncpa [#allocation5], 1
    %s430 = scalar_lea.sflag [#allocation5], 1
    %431 = vsyncpa %s430, 1

</llo_original>
